<compile_context>
chip_gen: v6e
topology: v6e:2x2x1
jax: 0.10.0
libtpu: 0.0.40
codegen_flags: <defaults>
</compile_context>

<pallas_src>
from functools import partial

import jax
import jax.numpy as jnp
from jax.experimental import pallas as pl
from jax.experimental.pallas import tpu as pltpu


def dqn_kernel(x_ref, w1_ref, b1_ref, w2_ref, b2_ref, out_ref):
    x = x_ref[...]                      # (TM, 4)    f32
    w1 = w1_ref[...]                    # (4, 256)   f32
    tm = x.shape[0]
    hidden = w1.shape[1]

    # fc1 + bias as 4 VPU FMAs (K=4 is too small for the MXU), then ReLU (f32).
    h = jnp.broadcast_to(b1_ref[...], (tm, hidden))
    for k in range(x.shape[1]):         # static unroll, K fixed by the module
        h = h + x[:, k:k + 1] * w1[k:k + 1, :]
    h = jnp.maximum(h, 0.0)

    # fc2 on the MXU, fully in f32 (MXU has huge slack at this size).
    q = jnp.dot(h, w2_ref[...], preferred_element_type=jnp.float32)
    out_ref[...] = (q + b2_ref[...]).astype(out_ref.dtype)


def prepare_params(w1, b1, w2, b2, n_pad=128):
    """One-time padding of fc2 to a lane-dense 128-wide output slab.

    Hoisted out of the forward hot path: call once at init and reuse.
    """
    H, n_actions = w2.shape
    assert n_actions <= n_pad
    w2p = jnp.zeros((H, n_pad), jnp.float32).at[:, :n_actions].set(w2)
    b2p = jnp.zeros((1, n_pad), jnp.float32).at[:, :n_actions].set(b2)
    return w1.astype(jnp.float32), b1.astype(jnp.float32), w2p, b2p


@partial(jax.jit, static_argnames=("n_actions", "tm"))
def dqn_forward(x, w1, b1, w2p, b2p, *, n_actions, tm=None):
    """x: (B, 4) f32 -> (B, n_actions) f32.

    tm=None (default): single grid step over the whole padded batch.
    On v7x, pass tm = padded_batch // 2 for one step per TensorCore.
    """
    B, K = x.shape
    H = w1.shape[1]
    n_pad = w2p.shape[1]

    if tm is None:
        tm = pl.cdiv(B, 8) * 8          # whole batch, sublane-aligned -> grid=(1,)
    bp = pl.cdiv(B, tm) * tm
    if bp != B:
        x = jnp.pad(x, ((0, bp - B), (0, 0)))

    cost = pl.CostEstimate(
        flops=2 * bp * (K * H + H * n_pad),
        transcendentals=0,
        bytes_accessed=(x.size * 4 + w1.size * 4 + b1.size * 4
                        + w2p.size * 4 + b2p.size * 4 + bp * n_pad * 4),
    )

    out = pl.pallas_call(
        dqn_kernel,
        out_shape=jax.ShapeDtypeStruct((bp, n_pad), jnp.float32),
        grid_spec=pltpu.PrefetchScalarGridSpec(
            num_scalar_prefetch=0,
            grid=(bp // tm,),
            in_specs=[
                pl.BlockSpec((tm, K), lambda i: (i, 0)),      # x tile
                pl.BlockSpec((K, H), lambda i: (0, 0)),       # W1 (resident)
                pl.BlockSpec((1, H), lambda i: (0, 0)),       # b1
                pl.BlockSpec((H, n_pad), lambda i: (0, 0)),   # W2 (padded, f32)
                pl.BlockSpec((1, n_pad), lambda i: (0, 0)),   # b2 (padded)
            ],
            out_specs=pl.BlockSpec((tm, n_pad), lambda i: (i, 0)),
        ),
        compiler_params=pltpu.CompilerParams(
            dimension_semantics=("parallel",),
        ),
        cost_estimate=cost,
    )(x, w1, b1, w2p, b2p)

    return out[:B, :n_actions]


def init_params(key, n_actions=2):
    """Deterministic init mimicking PyTorch's default Linear init U(-1/sqrt(fan_in), +)."""
    k1, k2, k3, k4 = jax.random.split(key, 4)
    in1, out1 = 4, 256
    in2, out2 = 256, n_actions
    lim1 = 1.0 / jnp.sqrt(jnp.float32(in1))
    lim2 = 1.0 / jnp.sqrt(jnp.float32(in2))
    w1 = jax.random.uniform(k1, (in1, out1), jnp.float32, -lim1, lim1)
    b1 = jax.random.uniform(k2, (1, out1), jnp.float32, -lim1, lim1)
    w2 = jax.random.uniform(k3, (in2, out2), jnp.float32, -lim2, lim2)
    b2 = jax.random.uniform(k4, (1, out2), jnp.float32, -lim2, lim2)
    return w1, b1, w2, b2


if __name__ == "__main__":
    key = jax.random.PRNGKey(0)
    k_x, k_p = jax.random.split(key)

    batch = 32          # small deterministic test batch
    n_actions = 2       # CartPole action space
    x = jax.random.normal(k_x, (batch, 4), jnp.float32)
    w1, b1, w2, b2 = init_params(k_p, n_actions=n_actions)

    # Hoisted out of the forward path: pad/cast weights once at init.
    w1p, b1p, w2p, b2p = prepare_params(w1, b1, w2, b2)

    out = dqn_forward(x, w1p, b1p, w2p, b2p, n_actions=n_actions)
    jax.block_until_ready(out)

    # Full-f32 kernel -> tight tolerance against the plain-JAX reference.
    ref = jnp.maximum(x @ w1 + b1, 0.0) @ w2 + b2
    assert out.shape == (batch, n_actions)
    assert jnp.allclose(out, ref, atol=1e-4, rtol=1e-4), \
        float(jnp.max(jnp.abs(out - ref)))

    # TODO(synk): the epsilon-greedy `act()` (python RNG + branch) is host-side
    # control flow, not part of the forward hot path; only forward() is implemented here.
    print("KERNEL_OK")
</pallas_src>

<mosaic_0001>
module attributes {stable_mosaic.version = 11 : i64} {
  func.func @dqn_kernel(%arg0: i32, %arg1: memref<32x4xf32, #tpu.memory_space<vmem>>, %arg2: memref<4x256xf32, #tpu.memory_space<vmem>>, %arg3: memref<1x256xf32, #tpu.memory_space<vmem>>, %arg4: memref<256x128xf32, #tpu.memory_space<vmem>>, %arg5: memref<1x128xf32, #tpu.memory_space<vmem>>, %arg6: memref<32x128xf32, #tpu.memory_space<vmem>>) attributes {dimension_semantics = [#tpu.dimension_semantics<parallel>], iteration_bounds = array<i64: 1>, scalar_prefetch = 0 : i64, scratch_operands = 0 : i64, tpu.core_type = #tpu.core_type<tc>, window_params = [{transform_indices = @transform_0, window_bounds = array<i64: 32, 4>}, {pipeline_mode = #tpu.pipeline_mode<synchronous>, transform_indices = @transform_1, window_bounds = array<i64: 4, 256>}, {pipeline_mode = #tpu.pipeline_mode<synchronous>, transform_indices = @transform_2, window_bounds = array<i64: 1, 256>}, {pipeline_mode = #tpu.pipeline_mode<synchronous>, transform_indices = @transform_3, window_bounds = array<i64: 256, 128>}, {pipeline_mode = #tpu.pipeline_mode<synchronous>, transform_indices = @transform_4, window_bounds = array<i64: 1, 128>}, {transform_indices = @transform_5, window_bounds = array<i64: 32, 128>}]} {
    %c0 = arith.constant 0 : index
    %c0_0 = arith.constant 0 : index
    %0 = vector.load %arg1[%c0, %c0_0] : memref<32x4xf32, #tpu.memory_space<vmem>>, vector<32x4xf32>
    %c0_1 = arith.constant 0 : index
    %c0_2 = arith.constant 0 : index
    %1 = vector.load %arg2[%c0_1, %c0_2] : memref<4x256xf32, #tpu.memory_space<vmem>>, vector<4x256xf32>
    %c0_3 = arith.constant 0 : index
    %c0_4 = arith.constant 0 : index
    %2 = vector.load %arg3[%c0_3, %c0_4] : memref<1x256xf32, #tpu.memory_space<vmem>>, vector<1x256xf32>
    %3 = vector.shape_cast %2 : vector<1x256xf32> to vector<1x256xf32>
    %4 = vector.broadcast %3 : vector<1x256xf32> to vector<32x256xf32>
    %5 = vector.extract_strided_slice %0 {offsets = [0, 0], sizes = [32, 1], strides = [1, 1]} : vector<32x4xf32> to vector<32x1xf32>
    %6 = vector.extract_strided_slice %1 {offsets = [0, 0], sizes = [1, 256], strides = [1, 1]} : vector<4x256xf32> to vector<1x256xf32>
    %7 = vector.broadcast %5 : vector<32x1xf32> to vector<32x256xf32>
    %8 = vector.broadcast %6 : vector<1x256xf32> to vector<32x256xf32>
    %9 = arith.mulf %7, %8 : vector<32x256xf32>
    %10 = arith.addf %4, %9 : vector<32x256xf32>
    %11 = vector.extract_strided_slice %0 {offsets = [0, 1], sizes = [32, 1], strides = [1, 1]} : vector<32x4xf32> to vector<32x1xf32>
    %12 = vector.extract_strided_slice %1 {offsets = [1, 0], sizes = [1, 256], strides = [1, 1]} : vector<4x256xf32> to vector<1x256xf32>
    %13 = vector.broadcast %11 : vector<32x1xf32> to vector<32x256xf32>
    %14 = vector.broadcast %12 : vector<1x256xf32> to vector<32x256xf32>
    %15 = arith.mulf %13, %14 : vector<32x256xf32>
    %16 = arith.addf %10, %15 : vector<32x256xf32>
    %17 = vector.extract_strided_slice %0 {offsets = [0, 2], sizes = [32, 1], strides = [1, 1]} : vector<32x4xf32> to vector<32x1xf32>
    %18 = vector.extract_strided_slice %1 {offsets = [2, 0], sizes = [1, 256], strides = [1, 1]} : vector<4x256xf32> to vector<1x256xf32>
    %19 = vector.broadcast %17 : vector<32x1xf32> to vector<32x256xf32>
    %20 = vector.broadcast %18 : vector<1x256xf32> to vector<32x256xf32>
    %21 = arith.mulf %19, %20 : vector<32x256xf32>
    %22 = arith.addf %16, %21 : vector<32x256xf32>
    %23 = vector.extract_strided_slice %0 {offsets = [0, 3], sizes = [32, 1], strides = [1, 1]} : vector<32x4xf32> to vector<32x1xf32>
    %24 = vector.extract_strided_slice %1 {offsets = [3, 0], sizes = [1, 256], strides = [1, 1]} : vector<4x256xf32> to vector<1x256xf32>
    %25 = vector.broadcast %23 : vector<32x1xf32> to vector<32x256xf32>
    %26 = vector.broadcast %24 : vector<1x256xf32> to vector<32x256xf32>
    %27 = arith.mulf %25, %26 : vector<32x256xf32>
    %28 = arith.addf %22, %27 : vector<32x256xf32>
    %cst = arith.constant 0.000000e+00 : f32
    %29 = vector.broadcast %cst : f32 to vector<32x256xf32>
    %30 = arith.maximumf %28, %29 : vector<32x256xf32>
    %c0_5 = arith.constant 0 : index
    %c0_6 = arith.constant 0 : index
    %31 = vector.load %arg4[%c0_5, %c0_6] : memref<256x128xf32, #tpu.memory_space<vmem>>, vector<256x128xf32>
    %cst_7 = arith.constant dense<0.000000e+00> : vector<32x128xf32>
    %32 = tpu.matmul %30, %31, %cst_7 {dimension_numbers = #tpu.dot_dimension_numbers<[1], [0], [0], [1], [0, 0, 1, 1], [], []>} : vector<32x256xf32>, vector<256x128xf32>, vector<32x128xf32> -> vector<32x128xf32>
    %c0_8 = arith.constant 0 : index
    %c0_9 = arith.constant 0 : index
    %33 = vector.load %arg5[%c0_8, %c0_9] : memref<1x128xf32, #tpu.memory_space<vmem>>, vector<1x128xf32>
    %34 = vector.broadcast %33 : vector<1x128xf32> to vector<32x128xf32>
    %35 = arith.addf %32, %34 : vector<32x128xf32>
    %c0_10 = arith.constant 0 : index
    %c0_11 = arith.constant 0 : index
    %36 = vector.load %arg6[%c0_10, %c0_11] : memref<32x128xf32, #tpu.memory_space<vmem>>, vector<32x128xf32>
    tpu.vector_store %arg6[%c0_10, %c0_11], %35 {strides = array<i32>} : memref<32x128xf32, #tpu.memory_space<vmem>>, vector<32x128xf32>,
    return
  }
  func.func @transform_0(%arg0: i32) -> (i32, i32) {
    %c0_i32 = arith.constant 0 : i32
    %c0_i32_0 = arith.constant 0 : i32
    return %arg0, %c0_i32 : i32, i32
  }
  func.func @transform_1(%arg0: i32) -> (i32, i32) {
    %c0_i32 = arith.constant 0 : i32
    %c0_i32_0 = arith.constant 0 : i32
    %c0_i32_1 = arith.constant 0 : i32
    return %c0_i32, %c0_i32_0 : i32, i32
  }
  func.func @transform_2(%arg0: i32) -> (i32, i32) {
    %c0_i32 = arith.constant 0 : i32
    %c0_i32_0 = arith.constant 0 : i32
    %c0_i32_1 = arith.constant 0 : i32
    return %c0_i32, %c0_i32_0 : i32, i32
  }
  func.func @transform_3(%arg0: i32) -> (i32, i32) {
    %c0_i32 = arith.constant 0 : i32
    %c0_i32_0 = arith.constant 0 : i32
    %c0_i32_1 = arith.constant 0 : i32
    return %c0_i32, %c0_i32_0 : i32, i32
  }
  func.func @transform_4(%arg0: i32) -> (i32, i32) {
    %c0_i32 = arith.constant 0 : i32
    %c0_i32_0 = arith.constant 0 : i32
    %c0_i32_1 = arith.constant 0 : i32
    return %c0_i32, %c0_i32_0 : i32, i32
  }
  func.func @transform_5(%arg0: i32) -> (i32, i32) {
    %c0_i32 = arith.constant 0 : i32
    %c0_i32_0 = arith.constant 0 : i32
    return %arg0, %c0_i32 : i32, i32
  }
}

</mosaic_0001>

<llo_original>
// kernel: dqn_forward.1
$region0: #{dqn_forward.1}
  #allocation0 [shape = 'u32[]', space=smem, size = 0x4, offset = 0x4, fixed_abs, tag = 'smem constant byte address 0x4 - core index']
  #allocation1 [shape = 'u32[144,128]{1,0:T(1,128)}', space=vmem, size = 0x12000, scoped, tag = 'internal scratch']
  %s0 = inlined_call_operand.vmem [shape: f32[32,4], index: 0, kind: input, shape index: {}]
  %s1 = inlined_call_operand.vmem [shape: f32[4,256], index: 1, kind: input, shape index: {}]
  %s2 = inlined_call_operand.vmem [shape: f32[1,256], index: 2, kind: input, shape index: {}]
  %s3 = inlined_call_operand.hbm [shape: f32[256,128], index: 3, kind: input, shape index: {}]
  %s4 = inlined_call_operand.vmem [shape: f32[1,128], index: 4, kind: input, shape index: {}]
  %s5 = inlined_call_operand.vmem [shape: f32[32,128], index: 5, kind: output, shape index: {}]
  %s6 = sld [smem:[#allocation0]]
  $region34: #{dqn_forward.1} parent=0
    _
  %s8 = ssub.s32 1, %s6
  %s9 = scalar_select 0, %s8, %s6
  $region1: #{dqn_forward.1} parent=0
    #allocation2 [shape = 'u8[131072]{0}', space=vmem, size = 0x20000, scoped, tag = 'input window, operand 3, single buffered']
    #allocation3 [shape = 's32[1]{0}', space=sflag, size = 0x4, scoped, tag = 'scoped memory for dqn_forward.1']
    %10 = vsyncpa [#allocation3], 0
    // Predicated region
    $region2: #{dqn_forward.1} parent=1 // pred_check
      _
    $region3: #{dqn_forward.1} parent=1 // pred_check_branch
      %12 = sbr.rel (0) target = $region5
    $region4: #{dqn_forward.1} parent=1 // pred_region
      _
    $region5: #{dqn_forward.1} parent=1 // pred_fallthru
      _
    // Predicated region
    $region6: #{dqn_forward.1} parent=1 // pred_check
      _
    $region7: #{dqn_forward.1} parent=1 // pred_check_branch
      %14 = sbr.rel (0) target = $region9
    $region8: #{dqn_forward.1} parent=1 // pred_region
      _
    $region9: #{dqn_forward.1} parent=1 // pred_fallthru
      _
    // Predicated region
    $region10: #{dqn_forward.1} parent=1 // pred_check
      _
    $region11: #{dqn_forward.1} parent=1 // pred_check_branch
      %16 = sbr.rel (0) target = $region13
    $region12: #{dqn_forward.1} parent=1 // pred_region
      _
    $region13: #{dqn_forward.1} parent=1 // pred_fallthru
      _
    // Predicated region
    $region14: #{dqn_forward.1} parent=1 // pred_check
      _
    $region15: #{dqn_forward.1} parent=1 // pred_check_branch
      %18 = sbr.rel (0) target = $region17
    $region16: #{dqn_forward.1} parent=1 // pred_region
      %s20 = ssub.s32 4096, 4096
      %21 = vsyncadd [#allocation3], %s20
      %s22 = sshll.u32 [#allocation2], 4
      %s23 = int_to_ptr.vmem [resolvable:$true] %s22
      %28 = dma.hbm_to_vmem [thread:$0]  %s3, 4096, %s23, [#allocation3], 128, 128, 8
    $region17: #{dqn_forward.1} parent=1 // pred_fallthru
      _
    // Predicated region
    $region18: #{dqn_forward.1} parent=1 // pred_check
      _
    $region19: #{dqn_forward.1} parent=1 // pred_check_branch
      %30 = sbr.rel (0) target = $region21
    $region20: #{dqn_forward.1} parent=1 // pred_region
      _
    $region21: #{dqn_forward.1} parent=1 // pred_fallthru
      _
    // Predicated region
    $region22: #{dqn_forward.1} parent=1 // pred_check
      _
    $region23: #{dqn_forward.1} parent=1 // pred_check_branch
      %32 = sbr.rel (0) target = $region25
    $region24: #{dqn_forward.1} parent=1 // pred_region
      %33 = dma.done [#allocation3], 4096
    $region25: #{dqn_forward.1} parent=1 // pred_fallthru
      _
    %v34 = vld [vmem:[%s0] sm:$0xff]
    %v35 = vld [vmem:[%s0 + $0x8] sm:$0xff]
    %v36 = vld [vmem:[%s0 + $0x10] sm:$0xff]
    %v37 = vld [vmem:[%s0 + $0x18] sm:$0xff]
    %v38 = vld [vmem:[%s1] sm:$0xff]
    %v39 = vld [vmem:[%s2] sm:$0x3]
    %v41 = vlaneseq
    %v42 = vshrl.u32 %v41, 7
    %v43 = vsub.s32 0, %v42
    %v44 = vrot.slane %v39, %v43
    %v45 = vlaneseq
    %v46 = vshrl.u32 %v45, 7
    %v47 = vsub.s32 1, %v46
    %v48 = vrot.slane %v39, %v47
    %52 = vset.pattern.permute.xlu0 0
    %53 = vperm.xlu0 %52, %v34
    %v54 = vpop.permute.xlu0 %53
    %57 = vset.pattern.permute.xlu0 0
    %58 = vperm.xlu0 %57, %v35
    %v59 = vpop.permute.xlu0 %58
    %62 = vset.pattern.permute.xlu0 0
    %63 = vperm.xlu0 %62, %v36
    %v64 = vpop.permute.xlu0 %63
    %67 = vset.pattern.permute.xlu0 0
    %68 = vperm.xlu0 %67, %v37
    %v69 = vpop.permute.xlu0 %68
    %v72 = vlaneseq
    %v73 = vshrl.u32 %v72, 7
    %v74 = vsub.s32 0, %v73
    %v75 = vrot.slane %v38, %v74
    %v76 = vlaneseq
    %v77 = vshrl.u32 %v76, 7
    %v78 = vsub.s32 4, %v77
    %v79 = vrot.slane %v38, %v78
    %v82 = vlaneseq
    %v83 = vshrl.u32 %v82, 7
    %v84 = vsub.s32 0, %v83
    %v85 = vrot.slane %v75, %v84
    %v86 = vlaneseq
    %v87 = vshrl.u32 %v86, 7
    %v88 = vsub.s32 0, %v87
    %v89 = vrot.slane %v79, %v88
    %v90 = vmul.f32 %v54, %v85
    %v91 = vmul.f32 %v54, %v89
    %v92 = vmul.f32 %v59, %v85
    %v93 = vmul.f32 %v59, %v89
    %v94 = vmul.f32 %v64, %v85
    %v95 = vmul.f32 %v64, %v89
    %v96 = vmul.f32 %v69, %v85
    %v97 = vmul.f32 %v69, %v89
    %v98 = vadd.f32 %v44, %v90
    %v99 = vadd.f32 %v48, %v91
    %v100 = vadd.f32 %v44, %v92
    %v101 = vadd.f32 %v48, %v93
    %v102 = vadd.f32 %v44, %v94
    %v103 = vadd.f32 %v48, %v95
    %v104 = vadd.f32 %v44, %v96
    %v105 = vadd.f32 %v48, %v97
    %106 = vset.pattern.permute.xlu0 1
    %107 = vperm.xlu0 %106, %v34
    %v108 = vpop.permute.xlu0 %107
    %110 = vset.pattern.permute.xlu0 1
    %111 = vperm.xlu0 %110, %v35
    %v112 = vpop.permute.xlu0 %111
    %114 = vset.pattern.permute.xlu0 1
    %115 = vperm.xlu0 %114, %v36
    %v116 = vpop.permute.xlu0 %115
    %118 = vset.pattern.permute.xlu0 1
    %119 = vperm.xlu0 %118, %v37
    %v120 = vpop.permute.xlu0 %119
    %v122 = vlaneseq
    %v123 = vshrl.u32 %v122, 7
    %v124 = vsub.s32 1, %v123
    %v125 = vrot.slane %v38, %v124
    %v126 = vlaneseq
    %v127 = vshrl.u32 %v126, 7
    %v128 = vsub.s32 5, %v127
    %v129 = vrot.slane %v38, %v128
    %v132 = vlaneseq
    %v133 = vshrl.u32 %v132, 7
    %v134 = vsub.s32 1, %v133
    %v135 = vrot.slane %v125, %v134
    %v136 = vlaneseq
    %v137 = vshrl.u32 %v136, 7
    %v138 = vsub.s32 1, %v137
    %v139 = vrot.slane %v129, %v138
    %v140 = vmul.f32 %v108, %v135
    %v141 = vmul.f32 %v108, %v139
    %v142 = vmul.f32 %v112, %v135
    %v143 = vmul.f32 %v112, %v139
    %v144 = vmul.f32 %v116, %v135
    %v145 = vmul.f32 %v116, %v139
    %v146 = vmul.f32 %v120, %v135
    %v147 = vmul.f32 %v120, %v139
    %v148 = vadd.f32 %v98, %v140
    %v149 = vadd.f32 %v99, %v141
    %v150 = vadd.f32 %v100, %v142
    %v151 = vadd.f32 %v101, %v143
    %v152 = vadd.f32 %v102, %v144
    %v153 = vadd.f32 %v103, %v145
    %v154 = vadd.f32 %v104, %v146
    %v155 = vadd.f32 %v105, %v147
    %156 = vset.pattern.permute.xlu0 2
    %157 = vperm.xlu0 %156, %v34
    %v158 = vpop.permute.xlu0 %157
    %160 = vset.pattern.permute.xlu0 2
    %161 = vperm.xlu0 %160, %v35
    %v162 = vpop.permute.xlu0 %161
    %164 = vset.pattern.permute.xlu0 2
    %165 = vperm.xlu0 %164, %v36
    %v166 = vpop.permute.xlu0 %165
    %168 = vset.pattern.permute.xlu0 2
    %169 = vperm.xlu0 %168, %v37
    %v170 = vpop.permute.xlu0 %169
    %v172 = vlaneseq
    %v173 = vshrl.u32 %v172, 7
    %v174 = vsub.s32 2, %v173
    %v175 = vrot.slane %v38, %v174
    %v176 = vlaneseq
    %v177 = vshrl.u32 %v176, 7
    %v178 = vsub.s32 6, %v177
    %v179 = vrot.slane %v38, %v178
    %v182 = vlaneseq
    %v183 = vshrl.u32 %v182, 7
    %v184 = vsub.s32 2, %v183
    %v185 = vrot.slane %v175, %v184
    %v186 = vlaneseq
    %v187 = vshrl.u32 %v186, 7
    %v188 = vsub.s32 2, %v187
    %v189 = vrot.slane %v179, %v188
    %v190 = vmul.f32 %v158, %v185
    %v191 = vmul.f32 %v158, %v189
    %v192 = vmul.f32 %v162, %v185
    %v193 = vmul.f32 %v162, %v189
    %v194 = vmul.f32 %v166, %v185
    %v195 = vmul.f32 %v166, %v189
    %v196 = vmul.f32 %v170, %v185
    %v197 = vmul.f32 %v170, %v189
    %v198 = vadd.f32 %v148, %v190
    %v199 = vadd.f32 %v149, %v191
    %v200 = vadd.f32 %v150, %v192
    %v201 = vadd.f32 %v151, %v193
    %v202 = vadd.f32 %v152, %v194
    %v203 = vadd.f32 %v153, %v195
    %v204 = vadd.f32 %v154, %v196
    %v205 = vadd.f32 %v155, %v197
    %206 = vset.pattern.permute.xlu0 3
    %207 = vperm.xlu0 %206, %v34
    %v208 = vpop.permute.xlu0 %207
    %210 = vset.pattern.permute.xlu0 3
    %211 = vperm.xlu0 %210, %v35
    %v212 = vpop.permute.xlu0 %211
    %214 = vset.pattern.permute.xlu0 3
    %215 = vperm.xlu0 %214, %v36
    %v216 = vpop.permute.xlu0 %215
    %218 = vset.pattern.permute.xlu0 3
    %219 = vperm.xlu0 %218, %v37
    %v220 = vpop.permute.xlu0 %219
    %v222 = vlaneseq
    %v223 = vshrl.u32 %v222, 7
    %v224 = vsub.s32 3, %v223
    %v225 = vrot.slane %v38, %v224
    %v226 = vlaneseq
    %v227 = vshrl.u32 %v226, 7
    %v228 = vsub.s32 7, %v227
    %v229 = vrot.slane %v38, %v228
    %v232 = vlaneseq
    %v233 = vshrl.u32 %v232, 7
    %v234 = vsub.s32 3, %v233
    %v235 = vrot.slane %v225, %v234
    %v236 = vlaneseq
    %v237 = vshrl.u32 %v236, 7
    %v238 = vsub.s32 3, %v237
    %v239 = vrot.slane %v229, %v238
    %v240 = vmul.f32 %v208, %v235
    %v241 = vmul.f32 %v208, %v239
    %v242 = vmul.f32 %v212, %v235
    %v243 = vmul.f32 %v212, %v239
    %v244 = vmul.f32 %v216, %v235
    %v245 = vmul.f32 %v216, %v239
    %v246 = vmul.f32 %v220, %v235
    %v247 = vmul.f32 %v220, %v239
    %v248 = vadd.f32 %v198, %v240
    %v249 = vadd.f32 %v199, %v241
    %v250 = vadd.f32 %v200, %v242
    %v251 = vadd.f32 %v201, %v243
    %v252 = vadd.f32 %v202, %v244
    %v253 = vadd.f32 %v203, %v245
    %v254 = vadd.f32 %v204, %v246
    %v255 = vadd.f32 %v205, %v247
    %v256 = vmax.f32 %v248, 0.0
    %v257 = vmax.f32 %v249, 0.0
    %v258 = vmax.f32 %v250, 0.0
    %v259 = vmax.f32 %v251, 0.0
    %v260 = vmax.f32 %v252, 0.0
    %v261 = vmax.f32 %v253, 0.0
    %v262 = vmax.f32 %v254, 0.0
    %v263 = vmax.f32 %v255, 0.0
    %v264 = vld [vmem:[#allocation2] sm:$0xff]
    %v265 = vld [vmem:[#allocation2 + $0x8] sm:$0xff]
    %v266 = vld [vmem:[#allocation2 + $0x10] sm:$0xff]
    %v267 = vld [vmem:[#allocation2 + $0x18] sm:$0xff]
    %v268 = vld [vmem:[#allocation2 + $0x20] sm:$0xff]
    %v269 = vld [vmem:[#allocation2 + $0x28] sm:$0xff]
    %v270 = vld [vmem:[#allocation2 + $0x30] sm:$0xff]
    %v271 = vld [vmem:[#allocation2 + $0x38] sm:$0xff]
    %v272 = vld [vmem:[#allocation2 + $0x40] sm:$0xff]
    %v273 = vld [vmem:[#allocation2 + $0x48] sm:$0xff]
    %v274 = vld [vmem:[#allocation2 + $0x50] sm:$0xff]
    %v275 = vld [vmem:[#allocation2 + $0x58] sm:$0xff]
    %v276 = vld [vmem:[#allocation2 + $0x60] sm:$0xff]
    %v277 = vld [vmem:[#allocation2 + $0x68] sm:$0xff]
    %v278 = vld [vmem:[#allocation2 + $0x70] sm:$0xff]
    %v279 = vld [vmem:[#allocation2 + $0x78] sm:$0xff]
    %v280 = vld [vmem:[#allocation2 + $0x80] sm:$0xff]
    %v281 = vld [vmem:[#allocation2 + $0x88] sm:$0xff]
    %v282 = vld [vmem:[#allocation2 + $0x90] sm:$0xff]
    %v283 = vld [vmem:[#allocation2 + $0x98] sm:$0xff]
    %v284 = vld [vmem:[#allocation2 + $0xa0] sm:$0xff]
    %v285 = vld [vmem:[#allocation2 + $0xa8] sm:$0xff]
    %v286 = vld [vmem:[#allocation2 + $0xb0] sm:$0xff]
    %v287 = vld [vmem:[#allocation2 + $0xb8] sm:$0xff]
    %v288 = vld [vmem:[#allocation2 + $0xc0] sm:$0xff]
    %v289 = vld [vmem:[#allocation2 + $0xc8] sm:$0xff]
    %v290 = vld [vmem:[#allocation2 + $0xd0] sm:$0xff]
    %v291 = vld [vmem:[#allocation2 + $0xd8] sm:$0xff]
    %v292 = vld [vmem:[#allocation2 + $0xe0] sm:$0xff]
    %v293 = vld [vmem:[#allocation2 + $0xe8] sm:$0xff]
    %v294 = vld [vmem:[#allocation2 + $0xf0] sm:$0xff]
    %v295 = vld [vmem:[#allocation2 + $0xf8] sm:$0xff]
    %v296 = vld [vmem:[%s4] sm:$0x1]
    %v298 = vlaneseq
    %v299 = vshrl.u32 %v298, 7
    %v300 = vsub.s32 0, %v299
    %v301 = vrot.slane %v296, %v300
    %303 = vmatprep.subr.mxu0 0.0
    %304 = vmatpush1.msra.mxu0 %v279
    %305 = vmatprep.subr.mxu0 0.0
    %306 = vmatpush1.msra.mxu0 %v278
    %307 = vmatprep.subr.mxu0 0.0
    %308 = vmatpush1.msra.mxu0 %v277
    %309 = vmatprep.subr.mxu0 0.0
    %310 = vmatpush1.msra.mxu0 %v276
    %311 = vmatprep.subr.mxu0 0.0
    %312 = vmatpush1.msra.mxu0 %v275
    %313 = vmatprep.subr.mxu0 0.0
    %314 = vmatpush1.msra.mxu0 %v274
    %315 = vmatprep.subr.mxu0 0.0
    %316 = vmatpush1.msra.mxu0 %v273
    %317 = vmatprep.subr.mxu0 0.0
    %318 = vmatpush1.msra.mxu0 %v272
    %319 = vmatprep.subr.mxu0 0.0
    %320 = vmatpush1.msra.mxu0 %v271
    %321 = vmatprep.subr.mxu0 0.0
    %322 = vmatpush1.msra.mxu0 %v270
    %323 = vmatprep.subr.mxu0 0.0
    %324 = vmatpush1.msra.mxu0 %v269
    %325 = vmatprep.subr.mxu0 0.0
    %326 = vmatpush1.msra.mxu0 %v268
    %327 = vmatprep.subr.mxu0 0.0
    %328 = vmatpush1.msra.mxu0 %v267
    %329 = vmatprep.subr.mxu0 0.0
    %330 = vmatpush1.msra.mxu0 %v266
    %331 = vmatprep.subr.mxu0 0.0
    %332 = vmatpush1.msra.mxu0 %v265
    %333 = vmatprep.subr.mxu0 0.0
    %334 = vmatpush1.msra.mxu0 %v264
    %335 = vmatprep.subr.mxu0 0.0
    %336 = vmatpush2.msra.mxu0 %v295
    %337 = vmatprep.subr.mxu0 0.0
    %338 = vmatpush2.msra.mxu0 %v294
    %339 = vmatprep.subr.mxu0 0.0
    %340 = vmatpush2.msra.mxu0 %v293
    %341 = vmatprep.subr.mxu0 0.0
    %342 = vmatpush2.msra.mxu0 %v292
    %343 = vmatprep.subr.mxu0 0.0
    %344 = vmatpush2.msra.mxu0 %v291
    %345 = vmatprep.subr.mxu0 0.0
    %346 = vmatpush2.msra.mxu0 %v290
    %347 = vmatprep.subr.mxu0 0.0
    %348 = vmatpush2.msra.mxu0 %v289
    %349 = vmatprep.subr.mxu0 0.0
    %350 = vmatpush2.msra.mxu0 %v288
    %351 = vmatprep.subr.mxu0 0.0
    %352 = vmatpush2.msra.mxu0 %v287
    %353 = vmatprep.subr.mxu0 0.0
    %354 = vmatpush2.msra.mxu0 %v286
    %355 = vmatprep.subr.mxu0 0.0
    %356 = vmatpush2.msra.mxu0 %v285
    %357 = vmatprep.subr.mxu0 0.0
    %358 = vmatpush2.msra.mxu0 %v284
    %359 = vmatprep.subr.mxu0 0.0
    %360 = vmatpush2.msra.mxu0 %v283
    %361 = vmatprep.subr.mxu0 0.0
    %362 = vmatpush2.msra.mxu0 %v282
    %363 = vmatprep.subr.mxu0 0.0
    %364 = vmatpush2.msra.mxu0 %v281
    %365 = vmatprep.subr.mxu0 0.0
    %366 = vmatpush2.msra.mxu0 %v280
    %367 = vmatprep.mubr.f32.mxu0 %v257
    %368 = vmatmul.mubr.f32.gmra.mxu0 %v256
    %v369 = vpop.f32.mrf.mxu0
    %v370 = vadd.f32 %v301, %v369
    %v371 = vpop.f32.mrf.mxu0
    %372 = vmatprep.mubr.f32.mxu0 %v259
    %373 = vmatmul.mubr.f32.gmra.mxu0 %v258
    %v374 = vpop.f32.mrf.mxu0
    %v375 = vadd.f32 %v301, %v374
    %v376 = vpop.f32.mrf.mxu0
    %377 = vmatprep.mubr.f32.mxu0 %v261
    %378 = vmatmul.mubr.f32.gmra.mxu0 %v260
    %v379 = vpop.f32.mrf.mxu0
    %v380 = vadd.f32 %v301, %v379
    %v381 = vpop.f32.mrf.mxu0
    %382 = vmatprep.mubr.f32.mxu0 %v263
    %383 = vmatmul.mubr.f32.gmra.mxu0 %v262
    %v384 = vpop.f32.mrf.mxu0
    %v385 = vadd.f32 %v301, %v384
    %v386 = vpop.f32.mrf.mxu0
    %387 = vdwg.mxu0
    %388 = vst [vmem:[%s5] sm:$0xff] %v370
    %389 = vst [vmem:[%s5 + $0x8] sm:$0xff] %v375
    %390 = vst [vmem:[%s5 + $0x10] sm:$0xff] %v380
    %391 = vst [vmem:[%s5 + $0x18] sm:$0xff] %v385
    // Predicated region
    $region26: #{dqn_forward.1} parent=1 // pred_check
      _
    $region27: #{dqn_forward.1} parent=1 // pred_check_branch
      %393 = sbr.rel (0) target = $region29
    $region28: #{dqn_forward.1} parent=1 // pred_region
      _
    $region29: #{dqn_forward.1} parent=1 // pred_fallthru
      _
    // Predicated region
    $region30: #{dqn_forward.1} parent=1 // pred_check
      _
    $region31: #{dqn_forward.1} parent=1 // pred_check_branch
      %395 = sbr.rel (0) target = $region33
    $region32: #{dqn_forward.1} parent=1 // pred_region
      _
    $region33: #{dqn_forward.1} parent=1 // pred_fallthru
      _
    %396 = vsyncpa [#allocation3], 1

</llo_original>
